<compile_context>
chip_gen: v5e
topology: v5e:2x2
jax: 0.10.0
libtpu: 0.0.40
codegen_flags: <defaults>
</compile_context>

<pallas_src>
import functools

import jax
import jax.numpy as jnp
from jax.experimental import pallas as pl
from jax.experimental.pallas import tpu as pltpu

# ---- Module hyper-parameters (consistent with the PyTorch __init__) ----
VOCAB_SIZE = 32
HIDDEN = 32                      # hidden_size
OUTPUT = 8                       # output_size
FILTER_LIST = ((2, 8), (3, 8))   # (kernel, out_channel) pairs
SEQ_LEN = 60                     # MaxPool1d(61 - k) over conv length (60 - k + 1) == global max
BATCH = 2

FEATURE_NUM = sum(c for _, c in FILTER_LIST)      # 16 = nn.Linear in_features
K_MAX = max(k for k, _ in FILTER_LIST)            # 3 taps in the merged tap-major slab
L_PAD = 64                                        # sequence padded to a sublane-tile multiple


def make_kernel(filter_list, batch, l_pad, seq_len, vocab):
    """Build the fused kernel body.

    refs = ids(B*L_pad,1) i32, fused(V, K_max*F) bf16, b_all(1,F) f32,
           lin_w(F,OUT) f32, lin_b(1,OUT) f32, out(B,OUT) f32
    """
    feat = sum(c for _, c in filter_list)
    k_max = max(k for k, _ in filter_list)
    rows = batch * l_pad

    def kernel(ids_ref, fused_ref, bias_ref, linw_ref, linb_ref, out_ref):
        # TODO(synk): nn.Dropout(dropout_rate) is eval-mode identity; not applied here.

        # (1) Fused embedding lookup + ALL conv taps of ALL filters: ONE MXU matmul.
        tok = ids_ref[...]                                               # (rows, 1) int32
        iota_v = jax.lax.broadcasted_iota(jnp.int32, (rows, vocab), 1)
        onehot = (iota_v == tok).astype(jnp.bfloat16)                    # exact 0/1 in bf16
        y = jnp.dot(onehot, fused_ref[...],
                    preferred_element_type=jnp.float32)                  # (rows, k_max*feat) f32

        # (2) Conv-over-time via fixed-shape sublane rolls of the tap-major slab (XLU) + adds (VPU).
        #     Rows that pull across a batch boundary / wrap around correspond to t >= t_out and are
        #     masked out below, and the k=2 filter's non-existent tap 2 columns are zero weights.
        acc = y[:, 0:feat]                                               # tap 0 contribution
        for dk in range(1, k_max):
            y_shift = pltpu.roll(y, shift=rows - dk, axis=0)             # row r <- row (r+dk) % rows
            acc = acc + y_shift[:, dk * feat:(dk + 1) * feat]            # (rows, feat) f32

        # (3) Per-filter valid-length mask (t >= t_out -> -inf), then one global max per batch.
        acc3 = acc.reshape(batch, l_pad, feat)                           # l_pad % 8 == 0 -> aligned
        col = jax.lax.broadcasted_iota(jnp.int32, (1, 1, feat), 2)
        tout = jnp.zeros((1, 1, feat), jnp.int32)
        off = 0
        for (k, c) in filter_list:                                       # static unrolled (2 filters)
            tout = jnp.where((col >= off) & (col < off + c), seq_len - k + 1, tout)
            off += c
        pos = jax.lax.broadcasted_iota(jnp.int32, (batch, l_pad, feat), 1)
        masked = jnp.where(pos < tout, acc3, -jnp.inf)
        pooled = jnp.max(masked, axis=1) + bias_ref[...]                 # (B, feat); bias hoisted out

        # (4) Final linear: one small f32 matmul + bias.
        out_ref[...] = jnp.dot(pooled, linw_ref[...],
                               preferred_element_type=jnp.float32) + linb_ref[...]

    return kernel


def _full_spec(shape):
    n = len(shape)
    return pl.BlockSpec(shape, lambda i, n=n: (0,) * n)


def pack_params(params):
    """Pack module parameters into the fused tap-major operand layout (done once at load time)."""
    # Tap-major conv slab: tap dk occupies columns [dk*F, (dk+1)*F); within a tap block the
    # channel order matches the concatenated feature order (filter 0 channels, then filter 1).
    w_all = jnp.zeros((HIDDEN, K_MAX * FEATURE_NUM), jnp.float32)
    b_blocks = []
    fcol = 0
    for (k, c) in FILTER_LIST:
        w = params[f'conv_w_{k}_{c}']                                    # (k, H, c)
        for dk in range(k):
            w_all = w_all.at[:, dk * FEATURE_NUM + fcol: dk * FEATURE_NUM + fcol + c].set(w[dk])
        b_blocks.append(params[f'conv_b_{k}_{c}'])                       # (1, c)
        fcol += c
    # Fold the embedding table into the slab: emb row 0 is zero (padding_idx=0), so fused[0] == 0.
    fused = (params['embedding'].astype(jnp.float32) @ w_all).astype(jnp.bfloat16)   # (V, 48)
    b_all = jnp.concatenate(b_blocks, axis=1).astype(jnp.float32)        # (1, 16)
    lin_w = params['lin_w'].astype(jnp.float32)                          # (16, OUT)
    lin_b = params['lin_b'].astype(jnp.float32)                          # (1, OUT)
    return fused, b_all, lin_w, lin_b


@functools.partial(jax.jit)
def cnn_classifier_forward(token_ids, packed):
    fused, b_all, lin_w, lin_b = packed
    B, L = token_ids.shape
    # Pad the sequence axis to a sublane-tile multiple with padding_idx=0 tokens; padded positions
    # never enter a valid conv window (t + k - 1 <= SEQ_LEN - 1) and are masked before the max.
    ids = jnp.pad(token_ids.astype(jnp.int32), ((0, 0), (0, L_PAD - L)))
    ids2d = ids.reshape(B * L_PAD, 1)                                    # lane-broadcastable layout

    operands = [ids2d, fused, b_all, lin_w, lin_b]
    in_specs = [_full_spec(o.shape) for o in operands]

    out = pl.pallas_call(
        make_kernel(FILTER_LIST, B, L_PAD, SEQ_LEN, VOCAB_SIZE),
        out_shape=jax.ShapeDtypeStruct((B, OUTPUT), jnp.float32),
        grid=(1,),                                   # tiny problem: single block, whole-array tiles
        in_specs=in_specs,
        out_specs=_full_spec((B, OUTPUT)),
        compiler_params=pltpu.CompilerParams(dimension_semantics=("arbitrary",)),
    )(*operands)
    return out


def reference_forward(token_ids, params):
    """Pure-JAX f32 reference replicating the PyTorch forward semantics."""
    x = params['embedding'][token_ids].astype(jnp.float32)               # (B, L, H)
    feats = []
    for (k, c) in FILTER_LIST:
        w = params[f'conv_w_{k}_{c}']
        b = params[f'conv_b_{k}_{c}']
        t_out = SEQ_LEN - k + 1
        acc = jnp.zeros((x.shape[0], t_out, c), jnp.float32)
        for dk in range(k):
            acc = acc + jnp.einsum('blh,hc->blc', x[:, dk:dk + t_out, :], w[dk])
        feats.append(jnp.max(acc + b, axis=1))                           # MaxPool1d(61-k) == global max
    feat = jnp.concatenate(feats, axis=-1)
    return feat @ params['lin_w'] + params['lin_b']


def init_params(key):
    params = {}
    k_emb, k_lw, k_lb, *k_convs = jax.random.split(key, 3 + 2 * len(FILTER_LIST))
    emb = jax.random.normal(k_emb, (VOCAB_SIZE, HIDDEN), jnp.float32) * 0.1
    emb = emb.at[0].set(0.0)                         # nn.Embedding(padding_idx=0)
    params['embedding'] = emb
    for i, (k, c) in enumerate(FILTER_LIST):
        kw, kb = k_convs[2 * i], k_convs[2 * i + 1]
        params[f'conv_w_{k}_{c}'] = jax.random.normal(kw, (k, HIDDEN, c), jnp.float32) * 0.1
        params[f'conv_b_{k}_{c}'] = jax.random.normal(kb, (1, c), jnp.float32) * 0.1
    params['lin_w'] = jax.random.normal(k_lw, (FEATURE_NUM, OUTPUT), jnp.float32) * 0.1
    params['lin_b'] = jax.random.normal(k_lb, (1, OUTPUT), jnp.float32) * 0.1
    return params


if __name__ == "__main__":
    key = jax.random.PRNGKey(0)
    pkey, xkey = jax.random.split(key)
    params = init_params(pkey)
    token_ids = jax.random.randint(xkey, (BATCH, SEQ_LEN), 0, VOCAB_SIZE, dtype=jnp.int32)

    packed = pack_params(params)                     # one-time weight packing (bf16 fused slab)

    out = cnn_classifier_forward(token_ids, packed)
    out = jax.block_until_ready(out)
    assert out.shape == (BATCH, OUTPUT), out.shape

    # Kernel uses a single bf16-rounded fused (emb @ conv) slab with f32 accumulation; the f32
    # reference agrees to ~1e-3, so a 1e-2 tolerance is a >10x margin while still catching any
    # packing / tap-offset / mask bug.
    ref = jax.block_until_ready(reference_forward(token_ids, params))
    assert jnp.allclose(out, ref, atol=1e-2, rtol=1e-2), (out, ref)

    print("KERNEL_OK")
</pallas_src>

<mosaic_0001>
module attributes {stable_mosaic.version = 11 : i64} {
  func.func @kernel(%arg0: i32, %arg1: memref<128x1xi32, #tpu.memory_space<vmem>>, %arg2: memref<32x48xbf16, #tpu.memory_space<vmem>>, %arg3: memref<1x16xf32, #tpu.memory_space<vmem>>, %arg4: memref<16x8xf32, #tpu.memory_space<vmem>>, %arg5: memref<1x8xf32, #tpu.memory_space<vmem>>, %arg6: memref<2x8xf32, #tpu.memory_space<vmem>>) attributes {dimension_semantics = [#tpu.dimension_semantics<arbitrary>], iteration_bounds = array<i64: 1>, scalar_prefetch = 0 : i64, scratch_operands = 0 : i64, tpu.core_type = #tpu.core_type<tc>, window_params = [{pipeline_mode = #tpu.pipeline_mode<synchronous>, transform_indices = @transform_0, window_bounds = array<i64: 128, 1>}, {pipeline_mode = #tpu.pipeline_mode<synchronous>, transform_indices = @transform_1, window_bounds = array<i64: 32, 48>}, {pipeline_mode = #tpu.pipeline_mode<synchronous>, transform_indices = @transform_2, window_bounds = array<i64: 1, 16>}, {pipeline_mode = #tpu.pipeline_mode<synchronous>, transform_indices = @transform_3, window_bounds = array<i64: 16, 8>}, {pipeline_mode = #tpu.pipeline_mode<synchronous>, transform_indices = @transform_4, window_bounds = array<i64: 1, 8>}, {pipeline_mode = #tpu.pipeline_mode<synchronous>, transform_indices = @transform_5, window_bounds = array<i64: 2, 8>}]} {
    %c0 = arith.constant 0 : index
    %c0_0 = arith.constant 0 : index
    %0 = vector.load %arg1[%c0, %c0_0] : memref<128x1xi32, #tpu.memory_space<vmem>>, vector<128x1xi32>
    %1 = tpu.iota {dimensions = array<i32: 1>} : vector<128x32xi32>
    %2 = vector.broadcast %0 : vector<128x1xi32> to vector<128x32xi32>
    %3 = arith.cmpi eq, %1, %2 : vector<128x32xi32>
    %4 = arith.extui %3 : vector<128x32xi1> to vector<128x32xi32>
    %5 = arith.sitofp %4 : vector<128x32xi32> to vector<128x32xf32>
    %6 = arith.truncf %5 : vector<128x32xf32> to vector<128x32xbf16>
    %c0_1 = arith.constant 0 : index
    %c0_2 = arith.constant 0 : index
    %7 = vector.load %arg2[%c0_1, %c0_2] : memref<32x48xbf16, #tpu.memory_space<vmem>>, vector<32x48xbf16>
    %cst = arith.constant dense<0.000000e+00> : vector<128x48xf32>
    %8 = tpu.matmul %6, %7, %cst {dimension_numbers = #tpu.dot_dimension_numbers<[1], [0], [0], [1], [0, 0, 1, 1], [], []>} : vector<128x32xbf16>, vector<32x48xbf16>, vector<128x48xf32> -> vector<128x48xf32>
    %9 = vector.extract_strided_slice %8 {offsets = [0, 0], sizes = [128, 16], strides = [1, 1]} : vector<128x48xf32> to vector<128x16xf32>
    %c127_i32 = arith.constant 127 : i32
    %10 = tpu.dynamic_rotate %8 by %c127_i32 dim 0 : vector<128x48xf32>, i32 -> vector<128x48xf32>
    %11 = vector.extract_strided_slice %10 {offsets = [0, 16], sizes = [128, 16], strides = [1, 1]} : vector<128x48xf32> to vector<128x16xf32>
    %12 = arith.addf %9, %11 : vector<128x16xf32>
    %c126_i32 = arith.constant 126 : i32
    %13 = tpu.dynamic_rotate %8 by %c126_i32 dim 0 : vector<128x48xf32>, i32 -> vector<128x48xf32>
    %14 = vector.extract_strided_slice %13 {offsets = [0, 32], sizes = [128, 16], strides = [1, 1]} : vector<128x48xf32> to vector<128x16xf32>
    %15 = arith.addf %12, %14 : vector<128x16xf32>
    %16 = vector.shape_cast %15 : vector<128x16xf32> to vector<2x64x16xf32>
    %17 = tpu.iota {dimensions = array<i32: 2>} : vector<1x1x16xi32>
    %c0_i32 = arith.constant 0 : i32
    %18 = vector.broadcast %c0_i32 : i32 to vector<1x1x16xi32>
    %c0_i32_3 = arith.constant 0 : i32
    %19 = vector.broadcast %c0_i32_3 : i32 to vector<1x1x16xi32>
    %20 = arith.cmpi sge, %17, %19 : vector<1x1x16xi32>
    %c8_i32 = arith.constant 8 : i32
    %21 = vector.broadcast %c8_i32 : i32 to vector<1x1x16xi32>
    %22 = arith.cmpi slt, %17, %21 : vector<1x1x16xi32>
    %23 = arith.andi %20, %22 : vector<1x1x16xi1>
    %c59_i32 = arith.constant 59 : i32
    %24 = vector.broadcast %c59_i32 : i32 to vector<1x1x16xi32>
    %25 = arith.select %23, %24, %18 : vector<1x1x16xi1>, vector<1x1x16xi32>
    %c8_i32_4 = arith.constant 8 : i32
    %26 = vector.broadcast %c8_i32_4 : i32 to vector<1x1x16xi32>
    %27 = arith.cmpi sge, %17, %26 : vector<1x1x16xi32>
    %c16_i32 = arith.constant 16 : i32
    %28 = vector.broadcast %c16_i32 : i32 to vector<1x1x16xi32>
    %29 = arith.cmpi slt, %17, %28 : vector<1x1x16xi32>
    %30 = arith.andi %27, %29 : vector<1x1x16xi1>
    %c58_i32 = arith.constant 58 : i32
    %31 = vector.broadcast %c58_i32 : i32 to vector<1x1x16xi32>
    %32 = arith.select %30, %31, %25 : vector<1x1x16xi1>, vector<1x1x16xi32>
    %33 = tpu.iota {dimensions = array<i32: 1>} : vector<2x64x16xi32>
    %34 = vector.broadcast %32 : vector<1x1x16xi32> to vector<2x64x16xi32>
    %35 = arith.cmpi slt, %33, %34 : vector<2x64x16xi32>
    %cst_5 = arith.constant 0xFF800000 : f32
    %36 = vector.broadcast %cst_5 : f32 to vector<2x64x16xf32>
    %37 = arith.select %35, %16, %36 : vector<2x64x16xi1>, vector<2x64x16xf32>
    %cst_6 = arith.constant dense<0xFF800000> : vector<2x16xf32>
    %38 = vector.multi_reduction <maximumf>, %37, %cst_6 [1] : vector<2x64x16xf32> to vector<2x16xf32>
    %c0_7 = arith.constant 0 : index
    %c0_8 = arith.constant 0 : index
    %39 = vector.load %arg3[%c0_7, %c0_8] : memref<1x16xf32, #tpu.memory_space<vmem>>, vector<1x16xf32>
    %40 = vector.broadcast %39 : vector<1x16xf32> to vector<2x16xf32>
    %41 = arith.addf %38, %40 : vector<2x16xf32>
    %c0_9 = arith.constant 0 : index
    %c0_10 = arith.constant 0 : index
    %42 = vector.load %arg4[%c0_9, %c0_10] : memref<16x8xf32, #tpu.memory_space<vmem>>, vector<16x8xf32>
    %cst_11 = arith.constant dense<0.000000e+00> : vector<2x8xf32>
    %43 = tpu.matmul %41, %42, %cst_11 {dimension_numbers = #tpu.dot_dimension_numbers<[1], [0], [0], [1], [0, 0, 1, 1], [], []>} : vector<2x16xf32>, vector<16x8xf32>, vector<2x8xf32> -> vector<2x8xf32>
    %c0_12 = arith.constant 0 : index
    %c0_13 = arith.constant 0 : index
    %44 = vector.load %arg5[%c0_12, %c0_13] : memref<1x8xf32, #tpu.memory_space<vmem>>, vector<1x8xf32>
    %45 = vector.broadcast %44 : vector<1x8xf32> to vector<2x8xf32>
    %46 = arith.addf %43, %45 : vector<2x8xf32>
    %c0_14 = arith.constant 0 : index
    %c0_15 = arith.constant 0 : index
    %47 = vector.load %arg6[%c0_14, %c0_15] : memref<2x8xf32, #tpu.memory_space<vmem>>, vector<2x8xf32>
    tpu.vector_store %arg6[%c0_14, %c0_15], %46 {strides = array<i32>} : memref<2x8xf32, #tpu.memory_space<vmem>>, vector<2x8xf32>,
    return
  }
  func.func @transform_0(%arg0: i32) -> (i32, i32) {
    %c0_i32 = arith.constant 0 : i32
    %c0_i32_0 = arith.constant 0 : i32
    %c0_i32_1 = arith.constant 0 : i32
    return %c0_i32, %c0_i32_0 : i32, i32
  }
  func.func @transform_1(%arg0: i32) -> (i32, i32) {
    %c0_i32 = arith.constant 0 : i32
    %c0_i32_0 = arith.constant 0 : i32
    %c0_i32_1 = arith.constant 0 : i32
    return %c0_i32, %c0_i32_0 : i32, i32
  }
  func.func @transform_2(%arg0: i32) -> (i32, i32) {
    %c0_i32 = arith.constant 0 : i32
    %c0_i32_0 = arith.constant 0 : i32
    %c0_i32_1 = arith.constant 0 : i32
    return %c0_i32, %c0_i32_0 : i32, i32
  }
  func.func @transform_3(%arg0: i32) -> (i32, i32) {
    %c0_i32 = arith.constant 0 : i32
    %c0_i32_0 = arith.constant 0 : i32
    %c0_i32_1 = arith.constant 0 : i32
    return %c0_i32, %c0_i32_0 : i32, i32
  }
  func.func @transform_4(%arg0: i32) -> (i32, i32) {
    %c0_i32 = arith.constant 0 : i32
    %c0_i32_0 = arith.constant 0 : i32
    %c0_i32_1 = arith.constant 0 : i32
    return %c0_i32, %c0_i32_0 : i32, i32
  }
  func.func @transform_5(%arg0: i32) -> (i32, i32) {
    %c0_i32 = arith.constant 0 : i32
    %c0_i32_0 = arith.constant 0 : i32
    %c0_i32_1 = arith.constant 0 : i32
    return %c0_i32, %c0_i32_0 : i32, i32
  }
}

</mosaic_0001>

<llo_original>
// kernel: cnn_classifier_forward.1
$region0: #{cnn_classifier_forward.1}
  #allocation0 [shape = 'u32[]', space=smem, size = 0x4, offset = 0x4, fixed_abs, tag = 'smem constant byte address 0x4 - core index']
  #allocation1 [shape = 'u32[72,128]{1,0:T(1,128)}', space=vmem, size = 0x9000, scoped, tag = 'internal scratch']
  %s0 = inlined_call_operand.vmem [shape: s32[128,1], index: 0, kind: input, shape index: {}]
  %s1 = inlined_call_operand.vmem [shape: bf16[32,48], index: 1, kind: input, shape index: {}]
  %s2 = inlined_call_operand.vmem [shape: f32[1,16], index: 2, kind: input, shape index: {}]
  %s3 = inlined_call_operand.vmem [shape: f32[16,8], index: 3, kind: input, shape index: {}]
  %s4 = inlined_call_operand.vmem [shape: f32[1,8], index: 4, kind: input, shape index: {}]
  %s5 = inlined_call_operand.hbm [shape: f32[2,8], index: 5, kind: output, shape index: {}]
  %s6 = sld [smem:[#allocation0]]
  $region30: #{cnn_classifier_forward.1} parent=0
    _
  %s8 = ssub.s32 1, %s6
  %s9 = scalar_select 0, %s8, %s6
  $region1: #{cnn_classifier_forward.1} parent=0
    #allocation2 [shape = 'u8[1024]{0}', space=vmem, size = 0x400, scoped, tag = 'output window, operand 0, single buffered']
    #allocation3 [shape = 's32[1]{0}', space=sflag, size = 0x4, scoped, tag = 'scoped memory for cnn_classifier_forward.1']
    %10 = vsyncpa [#allocation3], 0
    // Predicated region
    $region2: #{cnn_classifier_forward.1} parent=1 // pred_check
      _
    $region3: #{cnn_classifier_forward.1} parent=1 // pred_check_branch
      %12 = sbr.rel (0) target = $region5
    $region4: #{cnn_classifier_forward.1} parent=1 // pred_region
      _
    $region5: #{cnn_classifier_forward.1} parent=1 // pred_fallthru
      _
    // Predicated region
    $region6: #{cnn_classifier_forward.1} parent=1 // pred_check
      _
    $region7: #{cnn_classifier_forward.1} parent=1 // pred_check_branch
      %14 = sbr.rel (0) target = $region9
    $region8: #{cnn_classifier_forward.1} parent=1 // pred_region
      _
    $region9: #{cnn_classifier_forward.1} parent=1 // pred_fallthru
      _
    // Predicated region
    $region10: #{cnn_classifier_forward.1} parent=1 // pred_check
      _
    $region11: #{cnn_classifier_forward.1} parent=1 // pred_check_branch
      %16 = sbr.rel (0) target = $region13
    $region12: #{cnn_classifier_forward.1} parent=1 // pred_region
      _
    $region13: #{cnn_classifier_forward.1} parent=1 // pred_fallthru
      _
    // Predicated region
    $region14: #{cnn_classifier_forward.1} parent=1 // pred_check
      _
    $region15: #{cnn_classifier_forward.1} parent=1 // pred_check_branch
      %18 = sbr.rel (0) target = $region17
    $region16: #{cnn_classifier_forward.1} parent=1 // pred_region
      _
    $region17: #{cnn_classifier_forward.1} parent=1 // pred_fallthru
      _
    // Predicated region
    $region18: #{cnn_classifier_forward.1} parent=1 // pred_check
      _
    $region19: #{cnn_classifier_forward.1} parent=1 // pred_check_branch
      %20 = sbr.rel (0) target = $region21
    $region20: #{cnn_classifier_forward.1} parent=1 // pred_region
      _
    $region21: #{cnn_classifier_forward.1} parent=1 // pred_fallthru
      _
    %v22 = vld [vmem:[%s0] sm:$0xff]
    %v23 = vld [vmem:[%s0 + $0x8] sm:$0xff]
    %v24 = vld [vmem:[%s0 + $0x10] sm:$0xff]
    %v25 = vld [vmem:[%s0 + $0x18] sm:$0xff]
    %v26 = vld [vmem:[%s0 + $0x20] sm:$0xff]
    %v27 = vld [vmem:[%s0 + $0x28] sm:$0xff]
    %v28 = vld [vmem:[%s0 + $0x30] sm:$0xff]
    %v29 = vld [vmem:[%s0 + $0x38] sm:$0xff]
    %v30 = vld [vmem:[%s0 + $0x40] sm:$0xff]
    %v31 = vld [vmem:[%s0 + $0x48] sm:$0xff]
    %v32 = vld [vmem:[%s0 + $0x50] sm:$0xff]
    %v33 = vld [vmem:[%s0 + $0x58] sm:$0xff]
    %v34 = vld [vmem:[%s0 + $0x60] sm:$0xff]
    %v35 = vld [vmem:[%s0 + $0x68] sm:$0xff]
    %v36 = vld [vmem:[%s0 + $0x70] sm:$0xff]
    %v37 = vld [vmem:[%s0 + $0x78] sm:$0xff]
    %v38 = vlaneseq
    %v39 = vand.u32 %v38, 127
    %40 = vset.pattern.permute.xlu0 0
    %41 = vperm.xlu0 %40, %v22
    %v42 = vpop.permute.xlu0 %41
    %43 = vset.pattern.permute.xlu0 0
    %44 = vperm.xlu0 %43, %v23
    %v45 = vpop.permute.xlu0 %44
    %46 = vset.pattern.permute.xlu0 0
    %47 = vperm.xlu0 %46, %v24
    %v48 = vpop.permute.xlu0 %47
    %49 = vset.pattern.permute.xlu0 0
    %50 = vperm.xlu0 %49, %v25
    %v51 = vpop.permute.xlu0 %50
    %52 = vset.pattern.permute.xlu0 0
    %53 = vperm.xlu0 %52, %v26
    %v54 = vpop.permute.xlu0 %53
    %55 = vset.pattern.permute.xlu0 0
    %56 = vperm.xlu0 %55, %v27
    %v57 = vpop.permute.xlu0 %56
    %58 = vset.pattern.permute.xlu0 0
    %59 = vperm.xlu0 %58, %v28
    %v60 = vpop.permute.xlu0 %59
    %61 = vset.pattern.permute.xlu0 0
    %62 = vperm.xlu0 %61, %v29
    %v63 = vpop.permute.xlu0 %62
    %64 = vset.pattern.permute.xlu0 0
    %65 = vperm.xlu0 %64, %v30
    %v66 = vpop.permute.xlu0 %65
    %67 = vset.pattern.permute.xlu0 0
    %68 = vperm.xlu0 %67, %v31
    %v69 = vpop.permute.xlu0 %68
    %70 = vset.pattern.permute.xlu0 0
    %71 = vperm.xlu0 %70, %v32
    %v72 = vpop.permute.xlu0 %71
    %73 = vset.pattern.permute.xlu0 0
    %74 = vperm.xlu0 %73, %v33
    %v75 = vpop.permute.xlu0 %74
    %76 = vset.pattern.permute.xlu0 0
    %77 = vperm.xlu0 %76, %v34
    %v78 = vpop.permute.xlu0 %77
    %79 = vset.pattern.permute.xlu0 0
    %80 = vperm.xlu0 %79, %v35
    %v81 = vpop.permute.xlu0 %80
    %82 = vset.pattern.permute.xlu0 0
    %83 = vperm.xlu0 %82, %v36
    %v84 = vpop.permute.xlu0 %83
    %85 = vset.pattern.permute.xlu0 0
    %86 = vperm.xlu0 %85, %v37
    %v87 = vpop.permute.xlu0 %86
    %vm88 = vcmp.eq.s32.totalorder %v39, %v42
    %vm89 = vcmp.eq.s32.totalorder %v39, %v45
    %vm90 = vcmp.eq.s32.totalorder %v39, %v48
    %vm91 = vcmp.eq.s32.totalorder %v39, %v51
    %vm92 = vcmp.eq.s32.totalorder %v39, %v54
    %vm93 = vcmp.eq.s32.totalorder %v39, %v57
    %vm94 = vcmp.eq.s32.totalorder %v39, %v60
    %vm95 = vcmp.eq.s32.totalorder %v39, %v63
    %vm96 = vcmp.eq.s32.totalorder %v39, %v66
    %vm97 = vcmp.eq.s32.totalorder %v39, %v69
    %vm98 = vcmp.eq.s32.totalorder %v39, %v72
    %vm99 = vcmp.eq.s32.totalorder %v39, %v75
    %vm100 = vcmp.eq.s32.totalorder %v39, %v78
    %vm101 = vcmp.eq.s32.totalorder %v39, %v81
    %vm102 = vcmp.eq.s32.totalorder %v39, %v84
    %vm103 = vcmp.eq.s32.totalorder %v39, %v87
    %v104 = vsel %vm88, 1, 0
    %v105 = vsel %vm89, 1, 0
    %v106 = vsel %vm90, 1, 0
    %v107 = vsel %vm91, 1, 0
    %v108 = vsel %vm92, 1, 0
    %v109 = vsel %vm93, 1, 0
    %v110 = vsel %vm94, 1, 0
    %v111 = vsel %vm95, 1, 0
    %v112 = vsel %vm96, 1, 0
    %v113 = vsel %vm97, 1, 0
    %v114 = vsel %vm98, 1, 0
    %v115 = vsel %vm99, 1, 0
    %v116 = vsel %vm100, 1, 0
    %v117 = vsel %vm101, 1, 0
    %v118 = vsel %vm102, 1, 0
    %v119 = vsel %vm103, 1, 0
    %v120 = vcvt.s32.f32 %v104
    %v121 = vcvt.s32.f32 %v105
    %v122 = vcvt.s32.f32 %v106
    %v123 = vcvt.s32.f32 %v107
    %v124 = vcvt.s32.f32 %v108
    %v125 = vcvt.s32.f32 %v109
    %v126 = vcvt.s32.f32 %v110
    %v127 = vcvt.s32.f32 %v111
    %v128 = vcvt.s32.f32 %v112
    %v129 = vcvt.s32.f32 %v113
    %v130 = vcvt.s32.f32 %v114
    %v131 = vcvt.s32.f32 %v115
    %v132 = vcvt.s32.f32 %v116
    %v133 = vcvt.s32.f32 %v117
    %v134 = vcvt.s32.f32 %v118
    %v135 = vcvt.s32.f32 %v119
    %v136 = vpack.c.bf16 %v121, %v120
    %v137 = vpack.c.bf16 %v123, %v122
    %v138 = vpack.c.bf16 %v125, %v124
    %v139 = vpack.c.bf16 %v127, %v126
    %v140 = vpack.c.bf16 %v129, %v128
    %v141 = vpack.c.bf16 %v131, %v130
    %v142 = vpack.c.bf16 %v133, %v132
    %v143 = vpack.c.bf16 %v135, %v134
    %v144 = vld [vmem:[%s1] sm:$0xf]
    %v145 = vld [vmem:[%s1 + $0x4] sm:$0xf]
    %v146 = vld [vmem:[%s1 + $0x8] sm:$0xf]
    %v147 = vld [vmem:[%s1 + $0xc] sm:$0xf]
    %v152 = vunpack.c.l.b16 %v144
    %v153 = vunpack.c.l.b16 %v145
    %v154 = vunpack.c.l.b16 %v146
    %v155 = vunpack.c.l.b16 %v147
    %v156 = vpack.c.b16 %v153, %v152
    %v157 = vpack.c.b16 %v155, %v154
    %vm160 = vcmask 261120
    %v162 = vsel %vm160, %v136, 0
    %v165 = vsel %vm160, %v137, 0
    %v168 = vsel %vm160, %v138, 0
    %v171 = vsel %vm160, %v139, 0
    %v174 = vsel %vm160, %v140, 0
    %v177 = vsel %vm160, %v141, 0
    %v180 = vsel %vm160, %v142, 0
    %v183 = vsel %vm160, %v143, 0
    %185 = vmatpush.bf16.msra.mxu0 0
    %186 = vmatpush.bf16.msra.mxu0 0
    %187 = vmatpush.bf16.msra.mxu0 0
    %188 = vmatpush.bf16.msra.mxu0 0
    %189 = vmatpush.bf16.msra.mxu0 0
    %190 = vmatpush.bf16.msra.mxu0 0
    %191 = vmatpush.bf16.msra.mxu0 %v157
    %192 = vmatpush.bf16.msra.mxu0 %v156
    %193 = vmatmul.bf16.gmra.mxu0 %v162
    %v194 = vpop.f32.mrf.mxu0
    %v195 = vadd.f32 0.0, %v194
    %v196 = vpop.f32.mrf.mxu0
    %v197 = vadd.f32 0.0, %v196
    %198 = vmatmul.bf16.gmra.mxu0 %v165
    %v199 = vpop.f32.mrf.mxu0
    %v200 = vadd.f32 0.0, %v199
    %v201 = vpop.f32.mrf.mxu0
    %v202 = vadd.f32 0.0, %v201
    %203 = vmatmul.bf16.gmra.mxu0 %v168
    %v204 = vpop.f32.mrf.mxu0
    %v205 = vadd.f32 0.0, %v204
    %v206 = vpop.f32.mrf.mxu0
    %v207 = vadd.f32 0.0, %v206
    %208 = vmatmul.bf16.gmra.mxu0 %v171
    %v209 = vpop.f32.mrf.mxu0
    %v210 = vadd.f32 0.0, %v209
    %v211 = vpop.f32.mrf.mxu0
    %v212 = vadd.f32 0.0, %v211
    %213 = vmatmul.bf16.gmra.mxu0 %v174
    %v214 = vpop.f32.mrf.mxu0
    %v215 = vadd.f32 0.0, %v214
    %v216 = vpop.f32.mrf.mxu0
    %v217 = vadd.f32 0.0, %v216
    %218 = vmatmul.bf16.gmra.mxu0 %v177
    %v219 = vpop.f32.mrf.mxu0
    %v220 = vadd.f32 0.0, %v219
    %v221 = vpop.f32.mrf.mxu0
    %v222 = vadd.f32 0.0, %v221
    %223 = vmatmul.bf16.gmra.mxu0 %v180
    %v224 = vpop.f32.mrf.mxu0
    %v225 = vadd.f32 0.0, %v224
    %v226 = vpop.f32.mrf.mxu0
    %v227 = vadd.f32 0.0, %v226
    %228 = vmatmul.bf16.gmra.mxu0 %v183
    %v229 = vpop.f32.mrf.mxu0
    %v230 = vadd.f32 0.0, %v229
    %v231 = vpop.f32.mrf.mxu0
    %v232 = vadd.f32 0.0, %v231
    %233 = vdwg.mxu0
    %v234 = vrot.slane %v195, 1
    %v235 = vrot.slane %v197, 1
    %v236 = vrot.slane %v200, 1
    %v237 = vrot.slane %v202, 1
    %v238 = vrot.slane %v205, 1
    %v239 = vrot.slane %v207, 1
    %v240 = vrot.slane %v210, 1
    %v241 = vrot.slane %v212, 1
    %v242 = vrot.slane %v215, 1
    %v243 = vrot.slane %v217, 1
    %v244 = vrot.slane %v220, 1
    %v245 = vrot.slane %v222, 1
    %v246 = vrot.slane %v225, 1
    %v247 = vrot.slane %v227, 1
    %v248 = vrot.slane %v230, 1
    %v249 = vrot.slane %v232, 1
    %v250 = vlaneseq
    %v251 = vshrl.u32 %v250, 7
    %vm252 = vcmp.lt.s32.totalorder %v251, 7
    %v253 = vsel %vm252, %v248, %v249
    %v254 = vsel %vm252, %v247, %v248
    %v255 = vsel %vm252, %v246, %v247
    %v256 = vsel %vm252, %v245, %v246
    %v257 = vsel %vm252, %v244, %v245
    %v258 = vsel %vm252, %v243, %v244
    %v259 = vsel %vm252, %v242, %v243
    %v260 = vsel %vm252, %v241, %v242
    %v261 = vsel %vm252, %v240, %v241
    %v262 = vsel %vm252, %v239, %v240
    %v263 = vsel %vm252, %v238, %v239
    %v264 = vsel %vm252, %v237, %v238
    %v265 = vsel %vm252, %v236, %v237
    %v266 = vsel %vm252, %v235, %v236
    %v267 = vsel %vm252, %v234, %v235
    %v268 = vsel %vm252, %v249, %v234
    %285 = vrot.lane.b32.xlu0 %v267, 112
    %v286 = vpop.permute.xlu0 %285
    %287 = vrot.lane.b32.xlu0 %v266, 112
    %v288 = vpop.permute.xlu0 %287
    %289 = vrot.lane.b32.xlu0 %v265, 112
    %v290 = vpop.permute.xlu0 %289
    %291 = vrot.lane.b32.xlu0 %v264, 112
    %v292 = vpop.permute.xlu0 %291
    %293 = vrot.lane.b32.xlu0 %v263, 112
    %v294 = vpop.permute.xlu0 %293
    %295 = vrot.lane.b32.xlu0 %v262, 112
    %v296 = vpop.permute.xlu0 %295
    %297 = vrot.lane.b32.xlu0 %v261, 112
    %v298 = vpop.permute.xlu0 %297
    %299 = vrot.lane.b32.xlu0 %v260, 112
    %v300 = vpop.permute.xlu0 %299
    %301 = vrot.lane.b32.xlu0 %v259, 112
    %v302 = vpop.permute.xlu0 %301
    %303 = vrot.lane.b32.xlu0 %v258, 112
    %v304 = vpop.permute.xlu0 %303
    %305 = vrot.lane.b32.xlu0 %v257, 112
    %v306 = vpop.permute.xlu0 %305
    %307 = vrot.lane.b32.xlu0 %v256, 112
    %v308 = vpop.permute.xlu0 %307
    %309 = vrot.lane.b32.xlu0 %v255, 112
    %v310 = vpop.permute.xlu0 %309
    %311 = vrot.lane.b32.xlu0 %v254, 112
    %v312 = vpop.permute.xlu0 %311
    %313 = vrot.lane.b32.xlu0 %v253, 112
    %v314 = vpop.permute.xlu0 %313
    %315 = vrot.lane.b32.xlu0 %v268, 112
    %v316 = vpop.permute.xlu0 %315
    %v333 = vadd.f32 %v195, %v286
    %v334 = vadd.f32 %v197, %v288
    %v335 = vadd.f32 %v200, %v290
    %v336 = vadd.f32 %v202, %v292
    %v337 = vadd.f32 %v205, %v294
    %v338 = vadd.f32 %v207, %v296
    %v339 = vadd.f32 %v210, %v298
    %v340 = vadd.f32 %v212, %v300
    %v341 = vadd.f32 %v215, %v302
    %v342 = vadd.f32 %v217, %v304
    %v343 = vadd.f32 %v220, %v306
    %v344 = vadd.f32 %v222, %v308
    %v345 = vadd.f32 %v225, %v310
    %v346 = vadd.f32 %v227, %v312
    %v347 = vadd.f32 %v230, %v314
    %v348 = vadd.f32 %v232, %v316
    %v349 = vrot.slane %v195, 2
    %v350 = vrot.slane %v197, 2
    %v351 = vrot.slane %v200, 2
    %v352 = vrot.slane %v202, 2
    %v353 = vrot.slane %v205, 2
    %v354 = vrot.slane %v207, 2
    %v355 = vrot.slane %v210, 2
    %v356 = vrot.slane %v212, 2
    %v357 = vrot.slane %v215, 2
    %v358 = vrot.slane %v217, 2
    %v359 = vrot.slane %v220, 2
    %v360 = vrot.slane %v222, 2
    %v361 = vrot.slane %v225, 2
    %v362 = vrot.slane %v227, 2
    %v363 = vrot.slane %v230, 2
    %v364 = vrot.slane %v232, 2
    %vm365 = vcmp.lt.s32.totalorder %v251, 6
    %v366 = vsel %vm365, %v363, %v364
    %v367 = vsel %vm365, %v362, %v363
    %v368 = vsel %vm365, %v361, %v362
    %v369 = vsel %vm365, %v360, %v361
    %v370 = vsel %vm365, %v359, %v360
    %v371 = vsel %vm365, %v358, %v359
    %v372 = vsel %vm365, %v357, %v358
    %v373 = vsel %vm365, %v356, %v357
    %v374 = vsel %vm365, %v355, %v356
    %v375 = vsel %vm365, %v354, %v355
    %v376 = vsel %vm365, %v353, %v354
    %v377 = vsel %vm365, %v352, %v353
    %v378 = vsel %vm365, %v351, %v352
    %v379 = vsel %vm365, %v350, %v351
    %v380 = vsel %vm365, %v349, %v350
    %v381 = vsel %vm365, %v364, %v349
    %398 = vrot.lane.b32.xlu0 %v380, 96
    %v399 = vpop.permute.xlu0 %398
    %400 = vrot.lane.b32.xlu0 %v379, 96
    %v401 = vpop.permute.xlu0 %400
    %402 = vrot.lane.b32.xlu0 %v378, 96
    %v403 = vpop.permute.xlu0 %402
    %404 = vrot.lane.b32.xlu0 %v377, 96
    %v405 = vpop.permute.xlu0 %404
    %406 = vrot.lane.b32.xlu0 %v376, 96
    %v407 = vpop.permute.xlu0 %406
    %408 = vrot.lane.b32.xlu0 %v375, 96
    %v409 = vpop.permute.xlu0 %408
    %410 = vrot.lane.b32.xlu0 %v374, 96
    %v411 = vpop.permute.xlu0 %410
    %412 = vrot.lane.b32.xlu0 %v373, 96
    %v413 = vpop.permute.xlu0 %412
    %414 = vrot.lane.b32.xlu0 %v372, 96
    %v415 = vpop.permute.xlu0 %414
    %416 = vrot.lane.b32.xlu0 %v371, 96
    %v417 = vpop.permute.xlu0 %416
    %418 = vrot.lane.b32.xlu0 %v370, 96
    %v419 = vpop.permute.xlu0 %418
    %420 = vrot.lane.b32.xlu0 %v369, 96
    %v421 = vpop.permute.xlu0 %420
    %422 = vrot.lane.b32.xlu0 %v368, 96
    %v423 = vpop.permute.xlu0 %422
    %424 = vrot.lane.b32.xlu0 %v367, 96
    %v425 = vpop.permute.xlu0 %424
    %426 = vrot.lane.b32.xlu0 %v366, 96
    %v427 = vpop.permute.xlu0 %426
    %428 = vrot.lane.b32.xlu0 %v381, 96
    %v429 = vpop.permute.xlu0 %428
    %v446 = vadd.f32 %v333, %v399
    %v447 = vadd.f32 %v334, %v401
    %v448 = vadd.f32 %v335, %v403
    %v449 = vadd.f32 %v336, %v405
    %v450 = vadd.f32 %v337, %v407
    %v451 = vadd.f32 %v338, %v409
    %v452 = vadd.f32 %v339, %v411
    %v453 = vadd.f32 %v340, %v413
    %v454 = vadd.f32 %v341, %v415
    %v455 = vadd.f32 %v342, %v417
    %v456 = vadd.f32 %v343, %v419
    %v457 = vadd.f32 %v344, %v421
    %v458 = vadd.f32 %v345, %v423
    %v459 = vadd.f32 %v346, %v425
    %v460 = vadd.f32 %v347, %v427
    %v461 = vadd.f32 %v348, %v429
    %vm462 = vcmp.ge.s32.totalorder %v39, 0
    %vm463 = vcmp.lt.s32.totalorder %v39, 8
    %vm464 = vmand %vm462, %vm463
    %v465 = vsel %vm464, 59, 0
    %vm466 = vcmp.ge.s32.totalorder %v39, 8
    %vm467 = vcmp.lt.s32.totalorder %v39, 16
    %vm468 = vmand %vm466, %vm467
    %v469 = vsel %vm468, 58, %v465
    %v470 = vadd.s32 %v251, 8
    %v471 = vadd.s32 %v251, 16
    %v472 = vadd.s32 %v251, 24
    %v473 = vadd.s32 %v251, 32
    %v474 = vadd.s32 %v251, 40
    %v475 = vadd.s32 %v251, 48
    %v476 = vadd.s32 %v251, 56
    %vm477 = vcmp.lt.s32.totalorder %v251, %v469
    %vm478 = vcmp.lt.s32.totalorder %v470, %v469
    %vm479 = vcmp.lt.s32.totalorder %v471, %v469
    %vm480 = vcmp.lt.s32.totalorder %v472, %v469
    %vm481 = vcmp.lt.s32.totalorder %v473, %v469
    %vm482 = vcmp.lt.s32.totalorder %v474, %v469
    %vm483 = vcmp.lt.s32.totalorder %v475, %v469
    %vm484 = vcmp.lt.s32.totalorder %v476, %v469
    %v485 = vsel %vm477, %v446, -inf
    %v486 = vsel %vm478, %v447, -inf
    %v487 = vsel %vm479, %v448, -inf
    %v488 = vsel %vm480, %v449, -inf
    %v489 = vsel %vm481, %v450, -inf
    %v490 = vsel %vm482, %v451, -inf
    %v491 = vsel %vm483, %v452, -inf
    %v492 = vsel %vm484, %v453, -inf
    %v493 = vsel %vm477, %v454, -inf
    %v494 = vsel %vm478, %v455, -inf
    %v495 = vsel %vm479, %v456, -inf
    %v496 = vsel %vm480, %v457, -inf
    %v497 = vsel %vm481, %v458, -inf
    %v498 = vsel %vm482, %v459, -inf
    %v499 = vsel %vm483, %v460, -inf
    %v500 = vsel %vm484, %v461, -inf
    %vm501 = vcmask 130048
    %v502 = vsel %vm501, %v485, -inf
    %v503 = vsel %vm501, %v486, -inf
    %v504 = vsel %vm501, %v487, -inf
    %v505 = vmax.f32 %v502, %v504
    %v506 = vsel %vm501, %v488, -inf
    %v507 = vmax.f32 %v503, %v506
    %v508 = vsel %vm501, %v489, -inf
    %v509 = vmax.f32 %v505, %v508
    %v510 = vsel %vm501, %v490, -inf
    %v511 = vmax.f32 %v507, %v510
    %v512 = vsel %vm501, %v491, -inf
    %v513 = vmax.f32 %v509, %v512
    %v514 = vsel %vm501, %v492, -inf
    %v515 = vmax.f32 %v511, %v514
    %v516 = vmax.f32 %v513, %v515
    %v517 = vrot.slane %v516, 4
    %v518 = vmax.f32 %v516, %v517
    %v519 = vrot.slane %v518, 2
    %v520 = vmax.f32 %v518, %v519
    %v521 = vrot.slane %v520, 1
    %v522 = vmax.f32 %v520, %v521
    %v523 = vsel %vm501, %v493, -inf
    %v524 = vsel %vm501, %v494, -inf
    %v525 = vsel %vm501, %v495, -inf
    %v526 = vmax.f32 %v523, %v525
    %v527 = vsel %vm501, %v496, -inf
    %v528 = vmax.f32 %v524, %v527
    %v529 = vsel %vm501, %v497, -inf
    %v530 = vmax.f32 %v526, %v529
    %v531 = vsel %vm501, %v498, -inf
    %v532 = vmax.f32 %v528, %v531
    %v533 = vsel %vm501, %v499, -inf
    %v534 = vmax.f32 %v530, %v533
    %v535 = vsel %vm501, %v500, -inf
    %v536 = vmax.f32 %v532, %v535
    %v537 = vmax.f32 %v534, %v536
    %v538 = vrot.slane %v537, 4
    %v539 = vmax.f32 %v537, %v538
    %v540 = vrot.slane %v539, 2
    %v541 = vmax.f32 %v539, %v540
    %v542 = vrot.slane %v541, 1
    %v543 = vmax.f32 %v541, %v542
    %v544 = vld [vmem:[%s2] sm:$0x1]
    %v546 = vperm.slane %v544, 0
    %v548 = vadd.f32 %v522, %v546
    %v549 = vadd.f32 %v543, %v546
    %v550 = vld [vmem:[%s3] sm:$0xff]
    %v551 = vld [vmem:[%s3 + $0x8] sm:$0xff]
    %v552 = vld [vmem:[%s4] sm:$0x1]
    %v554 = vperm.slane %v552, 0
    %v558 = vrot.slane %v549, 7
    %vm559 = vcmask 1041409
    %v560 = vsel %vm559, %v558, %v548
    %v561 = vsel %vm501, %v560, 0
    %563 = vmatpush.msra.mxu0 0.0
    %564 = vmatpush.msra.mxu0 0.0
    %565 = vmatpush.msra.mxu0 0.0
    %566 = vmatpush.msra.mxu0 0.0
    %567 = vmatpush.msra.mxu0 0.0
    %568 = vmatpush.msra.mxu0 0.0
    %569 = vmatpush.msra.mxu0 0.0
    %570 = vmatpush.msra.mxu0 0.0
    %571 = vmatpush.msra.mxu0 0.0
    %572 = vmatpush.msra.mxu0 0.0
    %573 = vmatpush.msra.mxu0 0.0
    %574 = vmatpush.msra.mxu0 0.0
    %575 = vmatpush.msra.mxu0 0.0
    %576 = vmatpush.msra.mxu0 0.0
    %577 = vmatpush.msra.mxu0 %v551
    %578 = vmatpush.msra.mxu0 %v550
    %579 = vmatmul.f32.gmra.mxu0 %v561
    %v580 = vpop.f32.mrf.mxu0
    %v581 = vadd.f32 %v554, %v580
    %582 = vdwg.mxu0
    %vm583 = vcmask 58368
    %584 = vst.msk [vmem:[#allocation2] sm:$0x3] %vm583, %v581
    // Predicated region
    $region22: #{cnn_classifier_forward.1} parent=1 // pred_check
      _
    $region23: #{cnn_classifier_forward.1} parent=1 // pred_check_branch
      %586 = sbr.rel (0) target = $region25
    $region24: #{cnn_classifier_forward.1} parent=1 // pred_region
      %588 = vsyncadd [#allocation3], 0
      %s590 = sshll.u32 [#allocation2], 4
      %s591 = int_to_ptr.vmem [resolvable:$true] %s590
      %s592 = sshll.u32 %s5, 4
      %s593 = int_to_ptr.hbm [resolvable:$true] %s592
      %595 = dma.vmem_to_hbm [thread:$0]  %s591, 32, %s593, [#allocation3]
    $region25: #{cnn_classifier_forward.1} parent=1 // pred_fallthru
      _
    // Predicated region
    $region26: #{cnn_classifier_forward.1} parent=1 // pred_check
      _
    $region27: #{cnn_classifier_forward.1} parent=1 // pred_check_branch
      %597 = sbr.rel (0) target = $region29
    $region28: #{cnn_classifier_forward.1} parent=1 // pred_region
      %599 = dma.done [#allocation3], 32
    $region29: #{cnn_classifier_forward.1} parent=1 // pred_fallthru
      _
    %600 = vsyncpa [#allocation3], 1

</llo_original>
